<compile_context>
chip_gen: v6e
topology: v6e:2x2x1
jax: 0.10.0
libtpu: 0.0.40
codegen_flags: <defaults>
</compile_context>

<pallas_src>
import functools

import jax
import jax.numpy as jnp
from jax.experimental import pallas as pl
from jax.experimental.pallas import tpu as pltpu


def _vmem_capacity_bytes():
    """Per-core VMEM capacity; conservative fallback if the query fails."""
    try:
        return int(pltpu.get_tpu_info().vmem_capacity_bytes)
    except Exception:
        return 64 << 20  # v7x per-TC VMEM; safe lower bound for v5e/v6e too.


def _round_up(x, m):
    return ((x + m - 1) // m) * m


def _sublane_multiple(itemsize):
    # f32 -> 8, bf16 -> 16, int8/fp8 -> 32: keeps (B, D) output blocks aligned
    # to the packed sublane tile so stores / writeback DMAs stay unmasked.
    return max(8, 8 * (4 // max(1, itemsize)))


# ---------------------------------------------------------------------------
# Kernel bodies
# ---------------------------------------------------------------------------
def _onehot_gather_kernel(idx_ref, table_ref, out_ref):
    """Small-vocab path: out_block = one_hot(idx_block) @ table on the MXU."""
    # idx_ref:  (B, 1) int32 VMEM block
    # table_ref:(dict_size, D) VMEM (whole operand)
    # out_ref:  (B, D) VMEM block for chunk c
    idx = idx_ref[...]                                      # (B, 1)
    b = idx.shape[0]
    dict_size = table_ref.shape[0]
    cols = jax.lax.broadcasted_iota(jnp.int32, (b, dict_size), 1)
    onehot = (idx == cols).astype(table_ref.dtype)          # exact 0/1 selection
    out_ref[...] = jnp.dot(
        onehot, table_ref[...], preferred_element_type=jnp.float32
    ).astype(out_ref.dtype)


def _vmem_gather_kernel(block_rows, idx_ref, table_ref, out_ref):
    """Large-vocab, table-in-VMEM path: gather rows in full (8, D) slabs."""
    # idx_ref:  (n_pad,) int32 in SMEM (scalar prefetch)
    # table_ref:(dict_size, D) in VMEM (whole operand)
    # out_ref:  (B, D) VMEM block for chunk c
    B = block_rows
    GROUP = 8
    c = pl.program_id(0)
    base = c * B

    def group_body(g, carry):
        off = g * GROUP
        rows = [
            table_ref[pl.ds(idx_ref[base + off + r], 1), :]   # (1, D) each
            for r in range(GROUP)
        ]
        slab = jnp.concatenate(rows, axis=0)                  # (8, D)
        out_ref[pl.ds(pl.multiple_of(off, GROUP), GROUP), :] = slab
        return carry

    jax.lax.fori_loop(0, B // GROUP, group_body, 0, unroll=False)


def _hbm_gather_kernel(block_rows, idx_ref, table_ref, out_ref, buf, sems):
    """Table in HBM; manual double-buffered row-DMA gather (P4 pattern)."""
    # idx_ref:  (n_pad,) int32 in SMEM (scalar prefetch)
    # table_ref:(dict_size, D) raw HBM ref (memory_space=pl.ANY)
    # out_ref:  (B, D) VMEM block for chunk c
    # buf:      (2, B, D) VMEM staging double buffer
    # sems:     (2,) DMA semaphores -- one aggregate semaphore per slot
    B = block_rows
    c = pl.program_id(0)
    nc = pl.num_programs(0)
    slot = c % 2

    def fetch(chunk, into_slot):
        base = chunk * B

        def body(r, carry):
            pltpu.make_async_copy(
                table_ref.at[pl.ds(idx_ref[base + r], 1), :],
                buf.at[into_slot, pl.ds(r, 1), :],
                sems.at[into_slot],
            ).start()
            return carry

        # Keep many row DMAs in flight: random ~D*itemsize-byte reads are
        # latency-bound, not bandwidth-bound.
        jax.lax.fori_loop(0, B, body, 0, unroll=False)

    # Prime the pipeline on the first chunk.
    @pl.when(c == 0)
    def _():
        fetch(0, 0)

    # Prefetch next chunk into the other slot while we drain this one.
    @pl.when(c + 1 < nc)
    def _():
        fetch(c + 1, 1 - slot)

    # One aggregate wait per slot: the B row DMAs above all signal sems[slot];
    # a wait descriptor whose destination is the whole (B, D) slot buffer
    # consumes exactly the B * D * itemsize bytes they delivered.
    pltpu.make_async_copy(buf.at[slot], buf.at[slot], sems.at[slot]).wait()

    out_ref[...] = buf[slot]
    # TODO(synk): deepen to 3-4 slots (prefetch c+1 and c+2) if the HBM path
    # is ever the end-to-end bottleneck.


# ---------------------------------------------------------------------------
# Wrapper / dispatch
# ---------------------------------------------------------------------------
def embedding_gather(table, indices, *, block_rows=None,
                     max_table_vmem_bytes=None, onehot_max_dict=2048,
                     core_parallel=False):
    """Gather rows of `table` (dict_size, D) at `indices` (N,) -> (N, D)."""
    table = jnp.asarray(table)
    indices = jnp.asarray(indices, jnp.int32)
    n = int(indices.shape[0])
    dict_size, d = table.shape
    itemsize = jnp.dtype(table.dtype).itemsize

    # Clamp so out-of-range indices can never read adjacent VMEM / fault a DMA.
    indices = jnp.clip(indices, 0, dict_size - 1)

    cap = _vmem_capacity_bytes()
    table_bytes = dict_size * d * itemsize
    if max_table_vmem_bytes is None:
        # Keep the table resident whenever it fits with headroom for the
        # double-buffered (B, D) output blocks and scratch (not cap // 4).
        max_table_vmem_bytes = cap - (8 << 20)
    use_vmem_table = table_bytes <= max_table_vmem_bytes
    use_onehot = use_vmem_table and dict_size <= onehot_max_dict

    sub = _sublane_multiple(itemsize)
    max_b = 512 if use_vmem_table else 128
    if block_rows is None:
        B = min(max_b, _round_up(n, sub))
    else:
        B = _round_up(int(block_rows), sub)
    n_pad = _round_up(n, B)
    if n_pad != n:
        # Pad with (clamped-valid) index 0; padded rows are sliced off below.
        indices = jnp.pad(indices, (0, n_pad - n))
    num_chunks = n_pad // B

    # TODO(synk): for very large N, block the scalar-prefetched index vector
    # (SMEM-blocked in_spec of B ints per step) instead of prefetching all of
    # it, to avoid the next_pow2(4N) SMEM padding.

    out_shape = jax.ShapeDtypeStruct((n_pad, d), table.dtype)
    resident_bytes = table_bytes if use_vmem_table else 0
    vmem_limit = int(min(cap, max(32 << 20,
                                  resident_bytes + 6 * B * d * itemsize
                                  + (4 << 20))))
    # On v7x, pass core_parallel=True to split the chunk axis across the two
    # TensorCores (plain "parallel" does not change codegen); note the table is
    # then replicated into each TC's VMEM.
    par_sems = ((pltpu.CORE_PARALLEL,) if core_parallel else ("parallel",))

    if use_onehot:
        idx2d = indices.reshape(n_pad, 1)
        out = pl.pallas_call(
            _onehot_gather_kernel,
            out_shape=out_shape,
            grid=(num_chunks,),
            in_specs=[
                pl.BlockSpec((B, 1), lambda c: (c, 0)),
                pl.BlockSpec(memory_space=pltpu.MemorySpace.VMEM),
            ],
            out_specs=pl.BlockSpec((B, d), lambda c: (c, 0)),
            compiler_params=pltpu.CompilerParams(
                dimension_semantics=par_sems,
                vmem_limit_bytes=vmem_limit),
            cost_estimate=pl.CostEstimate(
                flops=2 * n_pad * dict_size * d, transcendentals=0,
                bytes_accessed=int(table_bytes + 2 * n_pad * d * itemsize
                                   + n_pad * 4)),
        )(idx2d, table)
    elif use_vmem_table:
        grid_spec = pltpu.PrefetchScalarGridSpec(
            num_scalar_prefetch=1,
            grid=(num_chunks,),
            in_specs=[pl.BlockSpec(memory_space=pltpu.MemorySpace.VMEM)],
            out_specs=pl.BlockSpec((B, d), lambda c, idx: (c, 0)),
        )
        out = pl.pallas_call(
            functools.partial(_vmem_gather_kernel, B),
            out_shape=out_shape,
            grid_spec=grid_spec,
            compiler_params=pltpu.CompilerParams(
                dimension_semantics=par_sems,
                vmem_limit_bytes=vmem_limit),
            cost_estimate=pl.CostEstimate(
                flops=0, transcendentals=0,
                bytes_accessed=int(table_bytes + 2 * n_pad * d * itemsize
                                   + n_pad * 4)),
        )(indices, table)
    else:
        grid_spec = pltpu.PrefetchScalarGridSpec(
            num_scalar_prefetch=1,
            grid=(num_chunks,),
            in_specs=[pl.BlockSpec(memory_space=pl.ANY)],   # table stays in HBM
            out_specs=pl.BlockSpec((B, d), lambda c, idx: (c, 0)),
            scratch_shapes=[
                pltpu.VMEM((2, B, d), table.dtype),
                pltpu.SemaphoreType.DMA((2,)),              # one sem per slot
            ],
        )
        out = pl.pallas_call(
            functools.partial(_hbm_gather_kernel, B),
            out_shape=out_shape,
            grid_spec=grid_spec,
            compiler_params=pltpu.CompilerParams(
                dimension_semantics=("arbitrary",),   # carried double-buffer state
                vmem_limit_bytes=vmem_limit),
            cost_estimate=pl.CostEstimate(
                flops=0, transcendentals=0,
                bytes_accessed=int(2 * n_pad * d * itemsize + n_pad * 4)),
        )(indices, table)

    return out[:n] if n_pad != n else out


class Line:
    """JAX/Pallas port of the PyTorch Line module (forward = embedding gathers)."""

    def __init__(self, dict_size, embed_dim=128, order="first", *, key):
        assert order in ("first", "second", "all"), \
            "Order should either be [first, second, all]"
        self.dict_size = dict_size
        self.embed_dim = embed_dim
        self.order = order
        k1, k2 = jax.random.split(key)
        # Matches torch's .uniform_(-0.5, 0.5) init (deterministic here).
        self.embeddings = jax.random.uniform(
            k1, (dict_size, embed_dim), jnp.float32, minval=-0.5, maxval=0.5)
        self.context_embeddings = jax.random.uniform(
            k2, (dict_size, embed_dim), jnp.float32, minval=-0.5, maxval=0.5)

    def __call__(self, nodeindex, v_i, v_j):
        del nodeindex  # unused in the reference forward as well
        v_i = jnp.asarray(v_i, jnp.int32)
        v_j = jnp.asarray(v_j, jnp.int32)
        n_i = v_i.shape[0]
        # TODO(synk): fuse the context-table lookup of order='second'/'all'
        # into the same pallas_call (two table in_specs) to save a launch.
        if self.order == "first":
            # Fused: both lookups hit the same table -> one kernel call.
            both = embedding_gather(self.embeddings,
                                    jnp.concatenate([v_i, v_j]))
            return both[:n_i], both[n_i:]
        elif self.order == "second":
            u_i = embedding_gather(self.embeddings, v_i)
            u_j_context = embedding_gather(self.context_embeddings, v_j)
            return u_i, u_j_context
        else:  # "all"
            both = embedding_gather(self.embeddings,
                                    jnp.concatenate([v_i, v_j]))
            u_j2 = embedding_gather(self.context_embeddings, v_j)
            return both[:n_i], both[n_i:], u_j2


if __name__ == "__main__":
    key = jax.random.PRNGKey(0)
    k_params, k_vi, k_vj = jax.random.split(key, 3)

    dict_size = 64
    embed_dim = 128
    n_samples = 16

    v_i = jax.random.randint(k_vi, (n_samples,), 0, dict_size, dtype=jnp.int32)
    v_j = jax.random.randint(k_vj, (n_samples,), 0, dict_size, dtype=jnp.int32)
    nodeindex = jnp.arange(n_samples, dtype=jnp.int32)  # unused, mirrors torch API

    ok = True
    for order in ("first", "second", "all"):
        model = Line(dict_size, embed_dim, order=order, key=k_params)
        outs = jax.block_until_ready(model(nodeindex, v_i, v_j))

        # Pure-JAX reference of the gather semantics.
        if order == "first":
            refs = (model.embeddings[v_i], model.embeddings[v_j])
        elif order == "second":
            refs = (model.embeddings[v_i], model.context_embeddings[v_j])
        else:
            refs = (model.embeddings[v_i], model.embeddings[v_j],
                    model.context_embeddings[v_j])
        for o, r in zip(outs, refs):
            ok &= (o.shape == (n_samples, embed_dim)) and bool(jnp.allclose(o, r))

    model = Line(dict_size, embed_dim, order="first", key=k_params)
    ref = model.embeddings[v_i]

    # Exercise the dynamic-gather VMEM path (forces the non-one-hot kernel).
    gat_out = jax.block_until_ready(
        embedding_gather(model.embeddings, v_i, onehot_max_dict=0,
                         block_rows=8))
    ok &= bool(jnp.allclose(gat_out, ref))

    # Exercise the HBM (large-table) fallback path with multiple chunks so the
    # double-buffered, aggregate-wait DMA gather is covered.
    hbm_out = jax.block_until_ready(
        embedding_gather(model.embeddings, v_i, max_table_vmem_bytes=0,
                         block_rows=8))
    ok &= bool(jnp.allclose(hbm_out, ref))

    print("KERNEL_OK" if ok else "KERNEL_MISMATCH")
</pallas_src>

<mosaic_0001>
module attributes {stable_mosaic.version = 11 : i64} {
  func.func @_onehot_gather_kernel(%arg0: i32, %arg1: memref<32x1xi32, #tpu.memory_space<vmem>>, %arg2: memref<64x128xf32, #tpu.memory_space<vmem>>, %arg3: memref<32x128xf32, #tpu.memory_space<vmem>>) attributes {dimension_semantics = [#tpu.dimension_semantics<parallel>], iteration_bounds = array<i64: 1>, scalar_prefetch = 0 : i64, scratch_operands = 0 : i64, tpu.core_type = #tpu.core_type<tc>, window_params = [{transform_indices = @transform_0, window_bounds = array<i64: 32, 1>}, {pipeline_mode = #tpu.pipeline_mode<synchronous>, transform_indices = @transform_1, window_bounds = array<i64: 64, 128>}, {transform_indices = @transform_2, window_bounds = array<i64: 32, 128>}]} {
    %c0 = arith.constant 0 : index
    %c0_0 = arith.constant 0 : index
    %0 = vector.load %arg1[%c0, %c0_0] : memref<32x1xi32, #tpu.memory_space<vmem>>, vector<32x1xi32>
    %1 = tpu.iota {dimensions = array<i32: 1>} : vector<32x64xi32>
    %2 = vector.broadcast %0 : vector<32x1xi32> to vector<32x64xi32>
    %3 = arith.cmpi eq, %2, %1 : vector<32x64xi32>
    %4 = arith.extui %3 : vector<32x64xi1> to vector<32x64xi32>
    %5 = arith.sitofp %4 : vector<32x64xi32> to vector<32x64xf32>
    %c0_1 = arith.constant 0 : index
    %c0_2 = arith.constant 0 : index
    %6 = vector.load %arg2[%c0_1, %c0_2] : memref<64x128xf32, #tpu.memory_space<vmem>>, vector<64x128xf32>
    %cst = arith.constant dense<0.000000e+00> : vector<32x128xf32>
    %7 = tpu.matmul %5, %6, %cst {dimension_numbers = #tpu.dot_dimension_numbers<[1], [0], [0], [1], [0, 0, 1, 1], [], []>} : vector<32x64xf32>, vector<64x128xf32>, vector<32x128xf32> -> vector<32x128xf32>
    %c0_3 = arith.constant 0 : index
    %c0_4 = arith.constant 0 : index
    %8 = vector.load %arg3[%c0_3, %c0_4] : memref<32x128xf32, #tpu.memory_space<vmem>>, vector<32x128xf32>
    tpu.vector_store %arg3[%c0_3, %c0_4], %7 {strides = array<i32>} : memref<32x128xf32, #tpu.memory_space<vmem>>, vector<32x128xf32>,
    return
  }
  func.func @transform_0(%arg0: i32) -> (i32, i32) {
    %c0_i32 = arith.constant 0 : i32
    %c0_i32_0 = arith.constant 0 : i32
    return %arg0, %c0_i32 : i32, i32
  }
  func.func @transform_1(%arg0: i32) -> (i32, i32) {
    %c0_i32 = arith.constant 0 : i32
    %c0_i32_0 = arith.constant 0 : i32
    %c0_i32_1 = arith.constant 0 : i32
    return %c0_i32, %c0_i32_0 : i32, i32
  }
  func.func @transform_2(%arg0: i32) -> (i32, i32) {
    %c0_i32 = arith.constant 0 : i32
    %c0_i32_0 = arith.constant 0 : i32
    return %arg0, %c0_i32 : i32, i32
  }
}

</mosaic_0001>

<llo_original>
// kernel: tpu_custom_call.1
$region0: #{tpu_custom_call.1}
  #allocation0 [shape = 'u32[]', space=smem, size = 0x4, offset = 0x4, fixed_abs, tag = 'smem constant byte address 0x4 - core index']
  #allocation1 [shape = 'u32[144,128]{1,0:T(1,128)}', space=vmem, size = 0x12000, scoped, tag = 'internal scratch']
  %s0 = inlined_call_operand.vmem [shape: s32[32,1], index: 0, kind: input, shape index: {}]
  %s1 = inlined_call_operand.hbm [shape: f32[64,128], index: 1, kind: input, shape index: {}]
  %s2 = inlined_call_operand.hbm [shape: f32[32,128], index: 2, kind: output, shape index: {}]
  %s3 = sld [smem:[#allocation0]]
  $region22: #{tpu_custom_call.1} parent=0
    _
  %s5 = ssub.s32 1, %s3
  %s6 = scalar_select 0, %s5, %s3
  $region1: #{tpu_custom_call.1} parent=0
    #allocation2 [shape = 'u8[32768]{0}', space=vmem, size = 0x8000, scoped, tag = 'input window, operand 1, single buffered']
    #allocation3 [shape = 's32[1]{0}', space=sflag, size = 0x4, scoped, tag = 'scoped memory for tpu_custom_call.1']
    #allocation4 [shape = 's32[1]{0}', space=sflag, size = 0x4, scoped, tag = 'scoped memory for tpu_custom_call.1']
    #allocation5 [shape = 'u8[16384]{0}', space=vmem, size = 0x4000, scoped, tag = 'output window, operand 0, single buffered']
    %7 = vsyncpa [#allocation3], 0
    %8 = vsyncpa [#allocation4], 0
    // Predicated region
    $region2: #{tpu_custom_call.1} parent=1 // pred_check
      _
    $region3: #{tpu_custom_call.1} parent=1 // pred_check_branch
      %10 = sbr.rel (0) target = $region5
    $region4: #{tpu_custom_call.1} parent=1 // pred_region
      _
    $region5: #{tpu_custom_call.1} parent=1 // pred_fallthru
      _
    // Predicated region
    $region6: #{tpu_custom_call.1} parent=1 // pred_check
      _
    $region7: #{tpu_custom_call.1} parent=1 // pred_check_branch
      %12 = sbr.rel (0) target = $region9
    $region8: #{tpu_custom_call.1} parent=1 // pred_region
      %s14 = ssub.s32 1024, 1024
      %15 = vsyncadd [#allocation3], %s14
      %s16 = sshll.u32 [#allocation2], 4
      %s17 = int_to_ptr.vmem [resolvable:$true] %s16
      %22 = dma.hbm_to_vmem [thread:$0]  %s1, 1024, %s17, [#allocation3], 128, 128, 8
    $region9: #{tpu_custom_call.1} parent=1 // pred_fallthru
      _
    // Predicated region
    $region10: #{tpu_custom_call.1} parent=1 // pred_check
      _
    $region11: #{tpu_custom_call.1} parent=1 // pred_check_branch
      %24 = sbr.rel (0) target = $region13
    $region12: #{tpu_custom_call.1} parent=1 // pred_region
      %25 = dma.done [#allocation3], 1024
    $region13: #{tpu_custom_call.1} parent=1 // pred_fallthru
      _
    %v26 = vld [vmem:[%s0] sm:$0xff]
    %v27 = vld [vmem:[%s0 + $0x8] sm:$0xff]
    %v28 = vld [vmem:[%s0 + $0x10] sm:$0xff]
    %v29 = vld [vmem:[%s0 + $0x18] sm:$0xff]
    %v30 = vlaneseq
    %v31 = vand.u32 %v30, 127
    %32 = vset.pattern.permute.xlu0 0
    %33 = vperm.xlu0 %32, %v26
    %v34 = vpop.permute.xlu0 %33
    %35 = vset.pattern.permute.xlu0 0
    %36 = vperm.xlu0 %35, %v27
    %v37 = vpop.permute.xlu0 %36
    %38 = vset.pattern.permute.xlu0 0
    %39 = vperm.xlu0 %38, %v28
    %v40 = vpop.permute.xlu0 %39
    %41 = vset.pattern.permute.xlu0 0
    %42 = vperm.xlu0 %41, %v29
    %v43 = vpop.permute.xlu0 %42
    %vm44 = vcmp.eq.s32.totalorder %v34, %v31
    %vm45 = vcmp.eq.s32.totalorder %v37, %v31
    %vm46 = vcmp.eq.s32.totalorder %v40, %v31
    %vm47 = vcmp.eq.s32.totalorder %v43, %v31
    %v48 = vsel %vm44, 1, 0
    %v49 = vsel %vm45, 1, 0
    %v50 = vsel %vm46, 1, 0
    %v51 = vsel %vm47, 1, 0
    %v52 = vcvt.s32.f32 %v48
    %v53 = vcvt.s32.f32 %v49
    %v54 = vcvt.s32.f32 %v50
    %v55 = vcvt.s32.f32 %v51
    %v56 = vld [vmem:[#allocation2] sm:$0xff]
    %v57 = vld [vmem:[#allocation2 + $0x8] sm:$0xff]
    %v58 = vld [vmem:[#allocation2 + $0x10] sm:$0xff]
    %v59 = vld [vmem:[#allocation2 + $0x18] sm:$0xff]
    %v60 = vld [vmem:[#allocation2 + $0x20] sm:$0xff]
    %v61 = vld [vmem:[#allocation2 + $0x28] sm:$0xff]
    %v62 = vld [vmem:[#allocation2 + $0x30] sm:$0xff]
    %v63 = vld [vmem:[#allocation2 + $0x38] sm:$0xff]
    %vm64 = vcmask 523264
    %v66 = vsel %vm64, %v52, 0
    %v69 = vsel %vm64, %v53, 0
    %v72 = vsel %vm64, %v54, 0
    %v75 = vsel %vm64, %v55, 0
    %77 = vmatprep.subr.mxu0 0.0
    %78 = vmatpush1.msra.mxu0 0.0
    %79 = vmatprep.subr.mxu0 0.0
    %80 = vmatpush1.msra.mxu0 0.0
    %81 = vmatprep.subr.mxu0 0.0
    %82 = vmatpush1.msra.mxu0 0.0
    %83 = vmatprep.subr.mxu0 0.0
    %84 = vmatpush1.msra.mxu0 0.0
    %85 = vmatprep.subr.mxu0 0.0
    %86 = vmatpush1.msra.mxu0 0.0
    %87 = vmatprep.subr.mxu0 0.0
    %88 = vmatpush1.msra.mxu0 0.0
    %89 = vmatprep.subr.mxu0 0.0
    %90 = vmatpush1.msra.mxu0 0.0
    %91 = vmatprep.subr.mxu0 0.0
    %92 = vmatpush1.msra.mxu0 0.0
    %93 = vmatprep.subr.mxu0 0.0
    %94 = vmatpush1.msra.mxu0 %v63
    %95 = vmatprep.subr.mxu0 0.0
    %96 = vmatpush1.msra.mxu0 %v62
    %97 = vmatprep.subr.mxu0 0.0
    %98 = vmatpush1.msra.mxu0 %v61
    %99 = vmatprep.subr.mxu0 0.0
    %100 = vmatpush1.msra.mxu0 %v60
    %101 = vmatprep.subr.mxu0 0.0
    %102 = vmatpush1.msra.mxu0 %v59
    %103 = vmatprep.subr.mxu0 0.0
    %104 = vmatpush1.msra.mxu0 %v58
    %105 = vmatprep.subr.mxu0 0.0
    %106 = vmatpush1.msra.mxu0 %v57
    %107 = vmatprep.subr.mxu0 0.0
    %108 = vmatpush1.msra.mxu0 %v56
    %109 = vmatprep.subr.mxu0 0.0
    %110 = vmatpush2.msra.mxu0 0.0
    %111 = vmatprep.subr.mxu0 0.0
    %112 = vmatpush2.msra.mxu0 0.0
    %113 = vmatprep.subr.mxu0 0.0
    %114 = vmatpush2.msra.mxu0 0.0
    %115 = vmatprep.subr.mxu0 0.0
    %116 = vmatpush2.msra.mxu0 0.0
    %117 = vmatprep.subr.mxu0 0.0
    %118 = vmatpush2.msra.mxu0 0.0
    %119 = vmatprep.subr.mxu0 0.0
    %120 = vmatpush2.msra.mxu0 0.0
    %121 = vmatprep.subr.mxu0 0.0
    %122 = vmatpush2.msra.mxu0 0.0
    %123 = vmatprep.subr.mxu0 0.0
    %124 = vmatpush2.msra.mxu0 0.0
    %125 = vmatprep.subr.mxu0 0.0
    %126 = vmatpush2.msra.mxu0 0.0
    %127 = vmatprep.subr.mxu0 0.0
    %128 = vmatpush2.msra.mxu0 0.0
    %129 = vmatprep.subr.mxu0 0.0
    %130 = vmatpush2.msra.mxu0 0.0
    %131 = vmatprep.subr.mxu0 0.0
    %132 = vmatpush2.msra.mxu0 0.0
    %133 = vmatprep.subr.mxu0 0.0
    %134 = vmatpush2.msra.mxu0 0.0
    %135 = vmatprep.subr.mxu0 0.0
    %136 = vmatpush2.msra.mxu0 0.0
    %137 = vmatprep.subr.mxu0 0.0
    %138 = vmatpush2.msra.mxu0 0.0
    %139 = vmatprep.subr.mxu0 0.0
    %140 = vmatpush2.msra.mxu0 0.0
    %141 = vmatprep.mubr.f32.mxu0 0.0
    %142 = vmatmul.mubr.f32.gmra.mxu0 %v66
    %v143 = vpop.f32.mrf.mxu0
    %v144 = vadd.f32 0.0, %v143
    %v145 = vpop.f32.mrf.mxu0
    %146 = vmatprep.mubr.f32.mxu0 0.0
    %147 = vmatmul.mubr.f32.gmra.mxu0 %v69
    %v148 = vpop.f32.mrf.mxu0
    %v149 = vadd.f32 0.0, %v148
    %v150 = vpop.f32.mrf.mxu0
    %151 = vmatprep.mubr.f32.mxu0 0.0
    %152 = vmatmul.mubr.f32.gmra.mxu0 %v72
    %v153 = vpop.f32.mrf.mxu0
    %v154 = vadd.f32 0.0, %v153
    %v155 = vpop.f32.mrf.mxu0
    %156 = vmatprep.mubr.f32.mxu0 0.0
    %157 = vmatmul.mubr.f32.gmra.mxu0 %v75
    %v158 = vpop.f32.mrf.mxu0
    %v159 = vadd.f32 0.0, %v158
    %v160 = vpop.f32.mrf.mxu0
    %161 = vdwg.mxu0
    %162 = vst [vmem:[#allocation5] sm:$0xff] %v144
    %163 = vst [vmem:[#allocation5 + $0x8] sm:$0xff] %v149
    %164 = vst [vmem:[#allocation5 + $0x10] sm:$0xff] %v154
    %165 = vst [vmem:[#allocation5 + $0x18] sm:$0xff] %v159
    // Predicated region
    $region14: #{tpu_custom_call.1} parent=1 // pred_check
      _
    $region15: #{tpu_custom_call.1} parent=1 // pred_check_branch
      %167 = sbr.rel (0) target = $region17
    $region16: #{tpu_custom_call.1} parent=1 // pred_region
      %s169 = ssub.s32 512, 512
      %170 = vsyncadd [#allocation4], %s169
      %s171 = sshll.u32 [#allocation5], 4
      %s172 = int_to_ptr.vmem [resolvable:$true] %s171
      %177 = dma.vmem_to_hbm [thread:$0]  %s172, 512, %s2, [#allocation4], 128, 128, 8
    $region17: #{tpu_custom_call.1} parent=1 // pred_fallthru
      _
    // Predicated region
    $region18: #{tpu_custom_call.1} parent=1 // pred_check
      _
    $region19: #{tpu_custom_call.1} parent=1 // pred_check_branch
      %179 = sbr.rel (0) target = $region21
    $region20: #{tpu_custom_call.1} parent=1 // pred_region
      %180 = dma.done [#allocation4], 512
    $region21: #{tpu_custom_call.1} parent=1 // pred_fallthru
      _
    %181 = vsyncpa [#allocation3], 1
    %182 = vsyncpa [#allocation4], 1

</llo_original>
